<compile_context>
chip_gen: v7x
topology: tpu7x:2x2x1
jax: 0.10.0
libtpu: 0.0.40
codegen_flags: <defaults>
</compile_context>

<pallas_src>
import functools

import jax
import jax.numpy as jnp
import numpy as np
from jax.experimental import pallas as pl
from jax.experimental.pallas import tpu as pltpu

LANE = 128
SUBLANE = 8
CHUNK = LANE * SUBLANE  # 1024: (8,128) tiling granule along the batch axis


def _round_up(x, m):
    return (x + m - 1) // m * m


def output_layer_kernel(x_ref, p_ref, o_ref):
    # x_ref: (3, NBT, 128)   rows: a = x00, b = x01, c = x11
    #                        batch is dense over (sublane, lane).
    # p_ref: (4, 17, 1, 1)   rows 0..2 = Linear weight columns W[:, k],
    #                        row 3 = bias.  (1,1) minor dims broadcast cheaply.
    # o_ref: (17, NBT, 128)  lane-dense output: o[j, n, l] = y[n*128 + l, j]
    a = x_ref[0]                                  # (NBT, 128), fully dense
    b = x_ref[1]
    c = x_ref[2]

    # --- analytic 2x2 symmetric matrix logarithm (eigen-free) ----------------
    t = 0.5 * (a + c)                             # mean eigenvalue (> 0 for SPD)
    h = 0.5 * (a - c)
    d = jnp.sqrt(h * h + b * b)                   # half eigenvalue gap (>= 0)

    tiny = jnp.float32(1e-30)
    lam1 = jnp.maximum(t + d, tiny)
    lam2 = jnp.maximum(t - d, tiny)               # clamp against FP rounding
    log1 = jnp.log(lam1)
    log2 = jnp.log(lam2)

    # divided difference s = (log lam1 - log lam2) / (lam1 - lam2); limit 1/t.
    # Single merged reciprocal chain; denominator clamped so zero-padded lanes
    # stay finite (their outputs are sliced away in the wrapper anyway).
    small = d <= jnp.float32(1e-6) * t
    denom = jnp.maximum(jnp.where(small, t, 2.0 * d), tiny)
    r = 1.0 / denom
    s = jnp.where(small, r, (log1 - log2) * r)

    # logm(M) = s * (M - lam2 I) + log(lam2) I   -> upper-triangle entries
    m00 = s * (a - lam2) + log2                   # (NBT, 128)
    m01 = s * b
    m11 = s * (c - lam2) + log2

    # --- Linear(3, 17), lane-dense: o[j] = W[j,0]*m00 + W[j,1]*m01 + W[j,2]*m11 + b[j]
    w0 = p_ref[0]                                 # (17, 1, 1)
    w1 = p_ref[1]
    w2 = p_ref[2]
    bb = p_ref[3]
    out = w0 * m00 + w1 * m01 + w2 * m11 + bb     # (17, NBT, 128)
    o_ref[...] = out.astype(o_ref.dtype)


@functools.partial(jax.jit, static_argnames=("tile_b",))
def output_layer_forward(x_spd, weight, bias, tile_b=32768):
    """x_spd: (B, 2, 2) float32 SPD matrices; weight: (17, 3); bias: (17,).

    Returns (B, 17) float32, matching SPDTangentSpace(2) -> Linear(3, 17)."""
    B = int(x_spd.shape[0])

    # Batch tile: large (grid-step overhead << per-tile DMA), multiple of the
    # 1024 (8x128) granule, but small enough that big batches get >= 2 grid
    # steps so v7x can shard the "parallel" axis across both TensorCores.
    tile_b = max(CHUNK, _round_up(int(tile_b), CHUNK))
    tile_b = min(tile_b, max(CHUNK, _round_up(-(-B // 2), CHUNK)))
    Bp = _round_up(max(B, 1), tile_b)
    NB = Bp // LANE
    nbt = tile_b // LANE

    # Single fused pack (under jit XLA fuses slice+stack+pad+reshape into one
    # pass over the input): 3 unique symmetric entries, zero-padded tail,
    # reshaped (for free) to the lane+sublane dense (3, NB, 128) layout.
    a = x_spd[:, 0, 0]
    b = x_spd[:, 0, 1]
    c = x_spd[:, 1, 1]
    x3 = jnp.stack([a, b, c], axis=0).astype(jnp.float32)          # (3, B)
    x3 = jnp.pad(x3, ((0, 0), (0, Bp - B)))                        # (3, Bp)
    x3 = x3.reshape(3, NB, LANE)                                   # free reshape

    # Weight columns + bias packed into one broadcast-ready constant.
    w = jnp.asarray(weight, jnp.float32)                           # (17, 3)
    bvec = jnp.asarray(bias, jnp.float32)                          # (17,)
    params = jnp.concatenate([w.T, bvec[None, :]], axis=0)         # (4, 17)
    params = params.reshape(4, 17, 1, 1)

    # Scoped-VMEM headroom for large tiles (v5e default is only 16 MiB).
    block_bytes = 4 * tile_b * (3 + 17)       # one input + one output block
    vmem_limit = int(min(100 << 20, max(32 << 20, 4 * block_bytes)))

    out = pl.pallas_call(
        output_layer_kernel,
        out_shape=jax.ShapeDtypeStruct((17, NB, LANE), jnp.float32),
        grid=(Bp // tile_b,),
        in_specs=[
            pl.BlockSpec((3, nbt, LANE), lambda i: (0, i, 0)),
            pl.BlockSpec((4, 17, 1, 1), lambda i: (0, 0, 0, 0)),   # VMEM-resident
        ],
        out_specs=pl.BlockSpec((17, nbt, LANE), lambda i: (0, i, 0)),
        compiler_params=pltpu.CompilerParams(
            dimension_semantics=("parallel",),
            vmem_limit_bytes=vmem_limit),
    )(x3, params)                                                  # (17, NB, 128)

    # One fused reshape + slice + transpose back to the module's (B, 17).
    return out.reshape(17, Bp)[:, :B].T


def _reference(x_spd, weight, bias):
    # Host numpy reference (float64): eigendecomposition matrix log +
    # upper-triangle vectorization + Linear.  Independent of the TPU path.
    x = np.asarray(x_spd, np.float64)
    w = np.asarray(weight, np.float64)
    bb = np.asarray(bias, np.float64)
    evals, evecs = np.linalg.eigh(x)                               # (B,2),(B,2,2)
    logm = np.einsum("bij,bj,bkj->bik", evecs, np.log(evals), evecs)
    v = np.stack([logm[:, 0, 0], logm[:, 0, 1], logm[:, 1, 1]], axis=-1)
    return v @ w.T + bb[None, :]


if __name__ == "__main__":
    key = jax.random.PRNGKey(0)
    k_x, k_w, k_b, k_x2 = jax.random.split(key, 4)

    # deterministic Linear(3, 17) params (PyTorch layout W:(17,3), b:(17,))
    bound = 1.0 / np.sqrt(3.0)
    weight = jax.random.uniform(k_w, (17, 3), minval=-bound, maxval=bound,
                                dtype=jnp.float32)
    bias = jax.random.uniform(k_b, (17,), minval=-bound, maxval=bound,
                              dtype=jnp.float32)

    def make_spd(k, n):
        A = jax.random.normal(k, (n, 2, 2), dtype=jnp.float32)
        return jnp.einsum("bij,bkj->bik", A, A) + 0.5 * jnp.eye(2, dtype=jnp.float32)

    # small batch (single tile, heavy zero padding path)
    x8 = make_spd(k_x, 8)
    out8 = jax.block_until_ready(output_layer_forward(x8, weight, bias))
    ref8 = _reference(x8, weight, bias)
    np.testing.assert_allclose(np.asarray(out8), ref8, rtol=1e-4, atol=1e-4)
    assert out8.shape == (8, 17) and out8.dtype == jnp.float32

    # ragged batch exercising the multi-tile "parallel" grid + masked tail
    x1500 = make_spd(k_x2, 1500)
    out1500 = jax.block_until_ready(
        output_layer_forward(x1500, weight, bias, tile_b=1024))
    ref1500 = _reference(x1500, weight, bias)
    np.testing.assert_allclose(np.asarray(out1500), ref1500, rtol=1e-4, atol=1e-4)
    assert out1500.shape == (1500, 17) and out1500.dtype == jnp.float32

    print("KERNEL_OK")
</pallas_src>

<mosaic_0001>
module attributes {stable_mosaic.version = 11 : i64} {
  func.func @output_layer_kernel(%arg0: i32, %arg1: memref<3x8x128xf32, #tpu.memory_space<vmem>>, %arg2: memref<4x17x1x1xf32, #tpu.memory_space<vmem>>, %arg3: memref<17x8x128xf32, #tpu.memory_space<vmem>>) attributes {dimension_semantics = [#tpu.dimension_semantics<parallel>], iteration_bounds = array<i64: 1>, scalar_prefetch = 0 : i64, scratch_operands = 0 : i64, tpu.core_type = #tpu.core_type<tc>, window_params = [{transform_indices = @transform_0, window_bounds = array<i64: 3, 8, 128>}, {pipeline_mode = #tpu.pipeline_mode<synchronous>, transform_indices = @transform_1, window_bounds = array<i64: 4, 17, 1, 1>}, {transform_indices = @transform_2, window_bounds = array<i64: 17, 8, 128>}]} {
    %c0 = arith.constant 0 : index
    %c0_0 = arith.constant 0 : index
    %c0_1 = arith.constant 0 : index
    %0 = vector.load %arg1[%c0, %c0_0, %c0_1] : memref<3x8x128xf32, #tpu.memory_space<vmem>>, vector<1x8x128xf32>
    %1 = vector.shape_cast %0 : vector<1x8x128xf32> to vector<8x128xf32>
    %c1 = arith.constant 1 : index
    %c0_2 = arith.constant 0 : index
    %c0_3 = arith.constant 0 : index
    %2 = vector.load %arg1[%c1, %c0_2, %c0_3] : memref<3x8x128xf32, #tpu.memory_space<vmem>>, vector<1x8x128xf32>
    %3 = vector.shape_cast %2 : vector<1x8x128xf32> to vector<8x128xf32>
    %c2 = arith.constant 2 : index
    %c0_4 = arith.constant 0 : index
    %c0_5 = arith.constant 0 : index
    %4 = vector.load %arg1[%c2, %c0_4, %c0_5] : memref<3x8x128xf32, #tpu.memory_space<vmem>>, vector<1x8x128xf32>
    %5 = vector.shape_cast %4 : vector<1x8x128xf32> to vector<8x128xf32>
    %6 = arith.addf %1, %5 : vector<8x128xf32>
    %cst = arith.constant 5.000000e-01 : f32
    %7 = vector.broadcast %cst : f32 to vector<8x128xf32>
    %8 = arith.mulf %7, %6 : vector<8x128xf32>
    %9 = arith.subf %1, %5 : vector<8x128xf32>
    %cst_6 = arith.constant 5.000000e-01 : f32
    %10 = vector.broadcast %cst_6 : f32 to vector<8x128xf32>
    %11 = arith.mulf %10, %9 : vector<8x128xf32>
    %12 = arith.mulf %11, %11 : vector<8x128xf32>
    %13 = arith.mulf %3, %3 : vector<8x128xf32>
    %14 = arith.addf %12, %13 : vector<8x128xf32>
    %15 = math.sqrt %14 : vector<8x128xf32>
    %16 = arith.addf %8, %15 : vector<8x128xf32>
    %cst_7 = arith.constant 1.000000e-30 : f32
    %17 = vector.broadcast %cst_7 : f32 to vector<8x128xf32>
    %18 = arith.maximumf %16, %17 : vector<8x128xf32>
    %19 = arith.subf %8, %15 : vector<8x128xf32>
    %cst_8 = arith.constant 1.000000e-30 : f32
    %20 = vector.broadcast %cst_8 : f32 to vector<8x128xf32>
    %21 = arith.maximumf %19, %20 : vector<8x128xf32>
    %22 = math.log %18 : vector<8x128xf32>
    %23 = math.log %21 : vector<8x128xf32>
    %cst_9 = arith.constant 9.99999997E-7 : f32
    %24 = vector.broadcast %cst_9 : f32 to vector<8x128xf32>
    %25 = arith.mulf %24, %8 : vector<8x128xf32>
    %26 = arith.cmpf ole, %15, %25 : vector<8x128xf32>
    %cst_10 = arith.constant 2.000000e+00 : f32
    %27 = vector.broadcast %cst_10 : f32 to vector<8x128xf32>
    %28 = arith.mulf %27, %15 : vector<8x128xf32>
    %29 = arith.select %26, %8, %28 : vector<8x128xi1>, vector<8x128xf32>
    %cst_11 = arith.constant 1.000000e-30 : f32
    %30 = vector.broadcast %cst_11 : f32 to vector<8x128xf32>
    %31 = arith.maximumf %29, %30 : vector<8x128xf32>
    %cst_12 = arith.constant 1.000000e+00 : f32
    %32 = vector.broadcast %cst_12 : f32 to vector<8x128xf32>
    %33 = arith.divf %32, %31 : vector<8x128xf32>
    %34 = arith.subf %22, %23 : vector<8x128xf32>
    %35 = arith.mulf %34, %33 : vector<8x128xf32>
    %36 = arith.select %26, %33, %35 : vector<8x128xi1>, vector<8x128xf32>
    %37 = arith.subf %1, %21 : vector<8x128xf32>
    %38 = arith.mulf %36, %37 : vector<8x128xf32>
    %39 = arith.addf %38, %23 : vector<8x128xf32>
    %40 = arith.mulf %36, %3 : vector<8x128xf32>
    %41 = arith.subf %5, %21 : vector<8x128xf32>
    %42 = arith.mulf %36, %41 : vector<8x128xf32>
    %43 = arith.addf %42, %23 : vector<8x128xf32>
    %c0_13 = arith.constant 0 : index
    %c0_14 = arith.constant 0 : index
    %c0_15 = arith.constant 0 : index
    %c0_16 = arith.constant 0 : index
    %44 = vector.load %arg2[%c0_13, %c0_14, %c0_15, %c0_16] : memref<4x17x1x1xf32, #tpu.memory_space<vmem>>, vector<1x17x1x1xf32>
    %45 = vector.shape_cast %44 : vector<1x17x1x1xf32> to vector<17x1x1xf32>
    %c1_17 = arith.constant 1 : index
    %c0_18 = arith.constant 0 : index
    %c0_19 = arith.constant 0 : index
    %c0_20 = arith.constant 0 : index
    %46 = vector.load %arg2[%c1_17, %c0_18, %c0_19, %c0_20] : memref<4x17x1x1xf32, #tpu.memory_space<vmem>>, vector<1x17x1x1xf32>
    %47 = vector.shape_cast %46 : vector<1x17x1x1xf32> to vector<17x1x1xf32>
    %c2_21 = arith.constant 2 : index
    %c0_22 = arith.constant 0 : index
    %c0_23 = arith.constant 0 : index
    %c0_24 = arith.constant 0 : index
    %48 = vector.load %arg2[%c2_21, %c0_22, %c0_23, %c0_24] : memref<4x17x1x1xf32, #tpu.memory_space<vmem>>, vector<1x17x1x1xf32>
    %49 = vector.shape_cast %48 : vector<1x17x1x1xf32> to vector<17x1x1xf32>
    %c3 = arith.constant 3 : index
    %c0_25 = arith.constant 0 : index
    %c0_26 = arith.constant 0 : index
    %c0_27 = arith.constant 0 : index
    %50 = vector.load %arg2[%c3, %c0_25, %c0_26, %c0_27] : memref<4x17x1x1xf32, #tpu.memory_space<vmem>>, vector<1x17x1x1xf32>
    %51 = vector.shape_cast %50 : vector<1x17x1x1xf32> to vector<17x1x1xf32>
    %52 = vector.shape_cast %39 : vector<8x128xf32> to vector<1x8x128xf32>
    %53 = vector.broadcast %45 : vector<17x1x1xf32> to vector<17x8x128xf32>
    %54 = vector.broadcast %52 : vector<1x8x128xf32> to vector<17x8x128xf32>
    %55 = arith.mulf %53, %54 : vector<17x8x128xf32>
    %56 = vector.shape_cast %40 : vector<8x128xf32> to vector<1x8x128xf32>
    %57 = vector.broadcast %47 : vector<17x1x1xf32> to vector<17x8x128xf32>
    %58 = vector.broadcast %56 : vector<1x8x128xf32> to vector<17x8x128xf32>
    %59 = arith.mulf %57, %58 : vector<17x8x128xf32>
    %60 = arith.addf %55, %59 : vector<17x8x128xf32>
    %61 = vector.shape_cast %43 : vector<8x128xf32> to vector<1x8x128xf32>
    %62 = vector.broadcast %49 : vector<17x1x1xf32> to vector<17x8x128xf32>
    %63 = vector.broadcast %61 : vector<1x8x128xf32> to vector<17x8x128xf32>
    %64 = arith.mulf %62, %63 : vector<17x8x128xf32>
    %65 = arith.addf %60, %64 : vector<17x8x128xf32>
    %66 = vector.broadcast %51 : vector<17x1x1xf32> to vector<17x8x128xf32>
    %67 = arith.addf %65, %66 : vector<17x8x128xf32>
    %c0_28 = arith.constant 0 : index
    %c0_29 = arith.constant 0 : index
    %c0_30 = arith.constant 0 : index
    %68 = vector.load %arg3[%c0_28, %c0_29, %c0_30] : memref<17x8x128xf32, #tpu.memory_space<vmem>>, vector<17x8x128xf32>
    tpu.vector_store %arg3[%c0_28, %c0_29, %c0_30], %67 {strides = array<i32>} : memref<17x8x128xf32, #tpu.memory_space<vmem>>, vector<17x8x128xf32>,
    return
  }
  func.func @transform_0(%arg0: i32) -> (i32, i32, i32) {
    %c0_i32 = arith.constant 0 : i32
    %c0_i32_0 = arith.constant 0 : i32
    %c0_i32_1 = arith.constant 0 : i32
    return %c0_i32, %arg0, %c0_i32_0 : i32, i32, i32
  }
  func.func @transform_1(%arg0: i32) -> (i32, i32, i32, i32) {
    %c0_i32 = arith.constant 0 : i32
    %c0_i32_0 = arith.constant 0 : i32
    %c0_i32_1 = arith.constant 0 : i32
    %c0_i32_2 = arith.constant 0 : i32
    %c0_i32_3 = arith.constant 0 : i32
    return %c0_i32, %c0_i32_0, %c0_i32_1, %c0_i32_2 : i32, i32, i32, i32
  }
  func.func @transform_2(%arg0: i32) -> (i32, i32, i32) {
    %c0_i32 = arith.constant 0 : i32
    %c0_i32_0 = arith.constant 0 : i32
    %c0_i32_1 = arith.constant 0 : i32
    return %c0_i32, %arg0, %c0_i32_0 : i32, i32, i32
  }
}

</mosaic_0001>

<llo_original>
// kernel: output_layer_forward.1
$region0: #{output_layer_forward.1}
  #allocation0 [shape = 'u32[]', space=smem, size = 0x4, offset = 0x4, fixed_abs, tag = 'smem constant byte address 0x4 - core index']
  #allocation1 [shape = 'u32[144,128]{1,0:T(1,128)}', space=vmem, size = 0x12000, scoped, tag = 'internal scratch']
  %s0 = inlined_call_operand.vmem [shape: f32[3,8,128], index: 0, kind: input, shape index: {}]
  %s1 = inlined_call_operand.vmem [shape: f32[4,17,1,1], index: 1, kind: input, shape index: {}]
  %s2 = inlined_call_operand.vmem [shape: f32[17,8,128], index: 2, kind: output, shape index: {}]
  %s3 = sld [smem:[#allocation0]]
  $region18: #{output_layer_forward.1} parent=0
    _
  %s5 = ssub.s32 1, %s3
  %s6 = scalar_select 0, %s5, %s3
  // Predicated region
  $region2: #{output_layer_forward.1} parent=0 // pred_check
    _
  $region3: #{output_layer_forward.1} parent=0 // pred_check_branch
    %8 = sbr.rel (0) target = $region5
  $region4: #{output_layer_forward.1} parent=0 // pred_region
    _
  $region5: #{output_layer_forward.1} parent=0 // pred_fallthru
    _
  // Predicated region
  $region6: #{output_layer_forward.1} parent=0 // pred_check
    _
  $region7: #{output_layer_forward.1} parent=0 // pred_check_branch
    %10 = sbr.rel (0) target = $region9
  $region8: #{output_layer_forward.1} parent=0 // pred_region
    _
  $region9: #{output_layer_forward.1} parent=0 // pred_fallthru
    _
  %v11 = vld [vmem:[%s0] sm:$0xff]
  %s12 = scalar_lea.vmem %s0, 8
  %v13 = vld [vmem:[%s12] sm:$0xff]
  %s14 = scalar_lea.vmem %s0, 16
  %v15 = vld [vmem:[%s14] sm:$0xff]
  %v16 = vadd.f32 %v11, %v15
  %v17 = vmul.f32 %v16, 0.5
  %v18 = vsub.f32 %v11, %v15
  %v19 = vmul.f32 %v18, 0.5
  %v20 = vmul.f32 %v19, %v19
  %v21 = vmul.f32 %v13, %v13
  %v22 = vadd.f32 %v20, %v21
  %v23 = vrsqrt.pop %v22
  %v24 = vmul.f32 %v22, %v23
  %vm25 = vcmp.eq.f32.partialorder %v22, inf
  %v26 = vsel %vm25, %v22, %v24
  %vm27 = vcmp.eq.f32.partialorder %v22, 0.0
  %v28 = vand.u32 %v22, 2147483648
  %v29 = vsel %vm27, %v28, %v26
  %v30 = vadd.f32 %v17, %v29
  %v31 = vmax.f32 %v30, 1e-30
  %v32 = vsub.f32 %v17, %v29
  %v33 = vmax.f32 %v32, 1e-30
  %v34 = vlog2.pop %v31
  %v35 = vmul.f32 %v34, 0.6931472
  %v36 = vlog2.pop %v33
  %v37 = vmul.f32 %v36, 0.6931472
  %v38 = vmul.f32 %v17, 1e-06
  %vm39 = vcmp.le.f32.partialorder %v29, %v38
  %v40 = vmul.f32 %v29, 2.0
  %v41 = vsel %vm39, %v17, %v40
  %v42 = vmax.f32 %v41, 1e-30
  %v43 = vrcp.pop %v42
  %v44 = vmul.f32 1.0, %v43
  %v45 = vsub.f32 %v35, %v37
  %v46 = vmul.f32 %v45, %v44
  %v47 = vsel %vm39, %v44, %v46
  %v48 = vsub.f32 %v11, %v33
  %v49 = vmul.f32 %v47, %v48
  %v50 = vadd.f32 %v49, %v37
  %v51 = vmul.f32 %v47, %v13
  %v52 = vsub.f32 %v15, %v33
  %v53 = vmul.f32 %v47, %v52
  %v54 = vadd.f32 %v53, %v37
  %v55 = vld [vmem:[%s1] sm:$0x1]
  %v56 = vld [vmem:[%s1 + $0x1] sm:$0x1]
  %v57 = vld [vmem:[%s1 + $0x2] sm:$0x1]
  %v58 = vld [vmem:[%s1 + $0x3] sm:$0x1]
  %v59 = vld [vmem:[%s1 + $0x4] sm:$0x1]
  %v60 = vld [vmem:[%s1 + $0x5] sm:$0x1]
  %v61 = vld [vmem:[%s1 + $0x6] sm:$0x1]
  %v62 = vld [vmem:[%s1 + $0x7] sm:$0x1]
  %v63 = vld [vmem:[%s1 + $0x8] sm:$0x1]
  %v64 = vld [vmem:[%s1 + $0x9] sm:$0x1]
  %v65 = vld [vmem:[%s1 + $0xa] sm:$0x1]
  %v66 = vld [vmem:[%s1 + $0xb] sm:$0x1]
  %v67 = vld [vmem:[%s1 + $0xc] sm:$0x1]
  %v68 = vld [vmem:[%s1 + $0xd] sm:$0x1]
  %v69 = vld [vmem:[%s1 + $0xe] sm:$0x1]
  %v70 = vld [vmem:[%s1 + $0xf] sm:$0x1]
  %v71 = vld [vmem:[%s1 + $0x10] sm:$0x1]
  %s72 = scalar_lea.vmem %s1, 17
  %v73 = vld [vmem:[%s72] sm:$0x1]
  %v74 = vld [vmem:[%s72 + $0x1] sm:$0x1]
  %v75 = vld [vmem:[%s72 + $0x2] sm:$0x1]
  %v76 = vld [vmem:[%s72 + $0x3] sm:$0x1]
  %v77 = vld [vmem:[%s72 + $0x4] sm:$0x1]
  %v78 = vld [vmem:[%s72 + $0x5] sm:$0x1]
  %v79 = vld [vmem:[%s72 + $0x6] sm:$0x1]
  %v80 = vld [vmem:[%s72 + $0x7] sm:$0x1]
  %v81 = vld [vmem:[%s72 + $0x8] sm:$0x1]
  %v82 = vld [vmem:[%s72 + $0x9] sm:$0x1]
  %v83 = vld [vmem:[%s72 + $0xa] sm:$0x1]
  %v84 = vld [vmem:[%s72 + $0xb] sm:$0x1]
  %v85 = vld [vmem:[%s72 + $0xc] sm:$0x1]
  %v86 = vld [vmem:[%s72 + $0xd] sm:$0x1]
  %v87 = vld [vmem:[%s72 + $0xe] sm:$0x1]
  %v88 = vld [vmem:[%s72 + $0xf] sm:$0x1]
  %v89 = vld [vmem:[%s72 + $0x10] sm:$0x1]
  %s90 = scalar_lea.vmem %s1, 34
  %v91 = vld [vmem:[%s90] sm:$0x1]
  %v92 = vld [vmem:[%s90 + $0x1] sm:$0x1]
  %v93 = vld [vmem:[%s90 + $0x2] sm:$0x1]
  %v94 = vld [vmem:[%s90 + $0x3] sm:$0x1]
  %v95 = vld [vmem:[%s90 + $0x4] sm:$0x1]
  %v96 = vld [vmem:[%s90 + $0x5] sm:$0x1]
  %v97 = vld [vmem:[%s90 + $0x6] sm:$0x1]
  %v98 = vld [vmem:[%s90 + $0x7] sm:$0x1]
  %v99 = vld [vmem:[%s90 + $0x8] sm:$0x1]
  %v100 = vld [vmem:[%s90 + $0x9] sm:$0x1]
  %v101 = vld [vmem:[%s90 + $0xa] sm:$0x1]
  %v102 = vld [vmem:[%s90 + $0xb] sm:$0x1]
  %v103 = vld [vmem:[%s90 + $0xc] sm:$0x1]
  %v104 = vld [vmem:[%s90 + $0xd] sm:$0x1]
  %v105 = vld [vmem:[%s90 + $0xe] sm:$0x1]
  %v106 = vld [vmem:[%s90 + $0xf] sm:$0x1]
  %v107 = vld [vmem:[%s90 + $0x10] sm:$0x1]
  %s108 = scalar_lea.vmem %s1, 51
  %v109 = vld [vmem:[%s108] sm:$0x1]
  %v110 = vld [vmem:[%s108 + $0x1] sm:$0x1]
  %v111 = vld [vmem:[%s108 + $0x2] sm:$0x1]
  %v112 = vld [vmem:[%s108 + $0x3] sm:$0x1]
  %v113 = vld [vmem:[%s108 + $0x4] sm:$0x1]
  %v114 = vld [vmem:[%s108 + $0x5] sm:$0x1]
  %v115 = vld [vmem:[%s108 + $0x6] sm:$0x1]
  %v116 = vld [vmem:[%s108 + $0x7] sm:$0x1]
  %v117 = vld [vmem:[%s108 + $0x8] sm:$0x1]
  %v118 = vld [vmem:[%s108 + $0x9] sm:$0x1]
  %v119 = vld [vmem:[%s108 + $0xa] sm:$0x1]
  %v120 = vld [vmem:[%s108 + $0xb] sm:$0x1]
  %v121 = vld [vmem:[%s108 + $0xc] sm:$0x1]
  %v122 = vld [vmem:[%s108 + $0xd] sm:$0x1]
  %v123 = vld [vmem:[%s108 + $0xe] sm:$0x1]
  %v124 = vld [vmem:[%s108 + $0xf] sm:$0x1]
  %v125 = vld [vmem:[%s108 + $0x10] sm:$0x1]
  %v143 = vlaneseq
  %v144 = vshrl.u32 %v143, 7
  %v145 = vsub.s32 0, %v144
  %v146 = vrot.slane %v55, %v145
  %v147 = vlaneseq
  %v148 = vshrl.u32 %v147, 7
  %v149 = vsub.s32 0, %v148
  %v150 = vrot.slane %v56, %v149
  %v151 = vlaneseq
  %v152 = vshrl.u32 %v151, 7
  %v153 = vsub.s32 0, %v152
  %v154 = vrot.slane %v57, %v153
  %v155 = vlaneseq
  %v156 = vshrl.u32 %v155, 7
  %v157 = vsub.s32 0, %v156
  %v158 = vrot.slane %v58, %v157
  %v159 = vlaneseq
  %v160 = vshrl.u32 %v159, 7
  %v161 = vsub.s32 0, %v160
  %v162 = vrot.slane %v59, %v161
  %v163 = vlaneseq
  %v164 = vshrl.u32 %v163, 7
  %v165 = vsub.s32 0, %v164
  %v166 = vrot.slane %v60, %v165
  %v167 = vlaneseq
  %v168 = vshrl.u32 %v167, 7
  %v169 = vsub.s32 0, %v168
  %v170 = vrot.slane %v61, %v169
  %v171 = vlaneseq
  %v172 = vshrl.u32 %v171, 7
  %v173 = vsub.s32 0, %v172
  %v174 = vrot.slane %v62, %v173
  %v175 = vlaneseq
  %v176 = vshrl.u32 %v175, 7
  %v177 = vsub.s32 0, %v176
  %v178 = vrot.slane %v63, %v177
  %v179 = vlaneseq
  %v180 = vshrl.u32 %v179, 7
  %v181 = vsub.s32 0, %v180
  %v182 = vrot.slane %v64, %v181
  %v183 = vlaneseq
  %v184 = vshrl.u32 %v183, 7
  %v185 = vsub.s32 0, %v184
  %v186 = vrot.slane %v65, %v185
  %v187 = vlaneseq
  %v188 = vshrl.u32 %v187, 7
  %v189 = vsub.s32 0, %v188
  %v190 = vrot.slane %v66, %v189
  %v191 = vlaneseq
  %v192 = vshrl.u32 %v191, 7
  %v193 = vsub.s32 0, %v192
  %v194 = vrot.slane %v67, %v193
  %v195 = vlaneseq
  %v196 = vshrl.u32 %v195, 7
  %v197 = vsub.s32 0, %v196
  %v198 = vrot.slane %v68, %v197
  %v199 = vlaneseq
  %v200 = vshrl.u32 %v199, 7
  %v201 = vsub.s32 0, %v200
  %v202 = vrot.slane %v69, %v201
  %v203 = vlaneseq
  %v204 = vshrl.u32 %v203, 7
  %v205 = vsub.s32 0, %v204
  %v206 = vrot.slane %v70, %v205
  %v207 = vlaneseq
  %v208 = vshrl.u32 %v207, 7
  %v209 = vsub.s32 0, %v208
  %v210 = vrot.slane %v71, %v209
  %211 = vset.pattern.permute.xlu0 0
  %212 = vperm.xlu0 %211, %v146
  %v213 = vpop.permute.xlu0 %212
  %215 = vset.pattern.permute.xlu0 0
  %216 = vperm.xlu0 %215, %v150
  %v217 = vpop.permute.xlu0 %216
  %219 = vset.pattern.permute.xlu0 0
  %220 = vperm.xlu0 %219, %v154
  %v221 = vpop.permute.xlu0 %220
  %223 = vset.pattern.permute.xlu0 0
  %224 = vperm.xlu0 %223, %v158
  %v225 = vpop.permute.xlu0 %224
  %227 = vset.pattern.permute.xlu0 0
  %228 = vperm.xlu0 %227, %v162
  %v229 = vpop.permute.xlu0 %228
  %231 = vset.pattern.permute.xlu0 0
  %232 = vperm.xlu0 %231, %v166
  %v233 = vpop.permute.xlu0 %232
  %235 = vset.pattern.permute.xlu0 0
  %236 = vperm.xlu0 %235, %v170
  %v237 = vpop.permute.xlu0 %236
  %239 = vset.pattern.permute.xlu0 0
  %240 = vperm.xlu0 %239, %v174
  %v241 = vpop.permute.xlu0 %240
  %243 = vset.pattern.permute.xlu0 0
  %244 = vperm.xlu0 %243, %v178
  %v245 = vpop.permute.xlu0 %244
  %247 = vset.pattern.permute.xlu0 0
  %248 = vperm.xlu0 %247, %v182
  %v249 = vpop.permute.xlu0 %248
  %251 = vset.pattern.permute.xlu0 0
  %252 = vperm.xlu0 %251, %v186
  %v253 = vpop.permute.xlu0 %252
  %255 = vset.pattern.permute.xlu0 0
  %256 = vperm.xlu0 %255, %v190
  %v257 = vpop.permute.xlu0 %256
  %259 = vset.pattern.permute.xlu0 0
  %260 = vperm.xlu0 %259, %v194
  %v261 = vpop.permute.xlu0 %260
  %263 = vset.pattern.permute.xlu0 0
  %264 = vperm.xlu0 %263, %v198
  %v265 = vpop.permute.xlu0 %264
  %267 = vset.pattern.permute.xlu0 0
  %268 = vperm.xlu0 %267, %v202
  %v269 = vpop.permute.xlu0 %268
  %271 = vset.pattern.permute.xlu0 0
  %272 = vperm.xlu0 %271, %v206
  %v273 = vpop.permute.xlu0 %272
  %275 = vset.pattern.permute.xlu0 0
  %276 = vperm.xlu0 %275, %v210
  %v277 = vpop.permute.xlu0 %276
  %v279 = vmul.f32 %v213, %v50
  %v280 = vmul.f32 %v217, %v50
  %v281 = vmul.f32 %v221, %v50
  %v282 = vmul.f32 %v225, %v50
  %v283 = vmul.f32 %v229, %v50
  %v284 = vmul.f32 %v233, %v50
  %v285 = vmul.f32 %v237, %v50
  %v286 = vmul.f32 %v241, %v50
  %v287 = vmul.f32 %v245, %v50
  %v288 = vmul.f32 %v249, %v50
  %v289 = vmul.f32 %v253, %v50
  %v290 = vmul.f32 %v257, %v50
  %v291 = vmul.f32 %v261, %v50
  %v292 = vmul.f32 %v265, %v50
  %v293 = vmul.f32 %v269, %v50
  %v294 = vmul.f32 %v273, %v50
  %v295 = vmul.f32 %v277, %v50
  %v313 = vlaneseq
  %v314 = vshrl.u32 %v313, 7
  %v315 = vsub.s32 0, %v314
  %v316 = vrot.slane %v73, %v315
  %v317 = vlaneseq
  %v318 = vshrl.u32 %v317, 7
  %v319 = vsub.s32 0, %v318
  %v320 = vrot.slane %v74, %v319
  %v321 = vlaneseq
  %v322 = vshrl.u32 %v321, 7
  %v323 = vsub.s32 0, %v322
  %v324 = vrot.slane %v75, %v323
  %v325 = vlaneseq
  %v326 = vshrl.u32 %v325, 7
  %v327 = vsub.s32 0, %v326
  %v328 = vrot.slane %v76, %v327
  %v329 = vlaneseq
  %v330 = vshrl.u32 %v329, 7
  %v331 = vsub.s32 0, %v330
  %v332 = vrot.slane %v77, %v331
  %v333 = vlaneseq
  %v334 = vshrl.u32 %v333, 7
  %v335 = vsub.s32 0, %v334
  %v336 = vrot.slane %v78, %v335
  %v337 = vlaneseq
  %v338 = vshrl.u32 %v337, 7
  %v339 = vsub.s32 0, %v338
  %v340 = vrot.slane %v79, %v339
  %v341 = vlaneseq
  %v342 = vshrl.u32 %v341, 7
  %v343 = vsub.s32 0, %v342
  %v344 = vrot.slane %v80, %v343
  %v345 = vlaneseq
  %v346 = vshrl.u32 %v345, 7
  %v347 = vsub.s32 0, %v346
  %v348 = vrot.slane %v81, %v347
  %v349 = vlaneseq
  %v350 = vshrl.u32 %v349, 7
  %v351 = vsub.s32 0, %v350
  %v352 = vrot.slane %v82, %v351
  %v353 = vlaneseq
  %v354 = vshrl.u32 %v353, 7
  %v355 = vsub.s32 0, %v354
  %v356 = vrot.slane %v83, %v355
  %v357 = vlaneseq
  %v358 = vshrl.u32 %v357, 7
  %v359 = vsub.s32 0, %v358
  %v360 = vrot.slane %v84, %v359
  %v361 = vlaneseq
  %v362 = vshrl.u32 %v361, 7
  %v363 = vsub.s32 0, %v362
  %v364 = vrot.slane %v85, %v363
  %v365 = vlaneseq
  %v366 = vshrl.u32 %v365, 7
  %v367 = vsub.s32 0, %v366
  %v368 = vrot.slane %v86, %v367
  %v369 = vlaneseq
  %v370 = vshrl.u32 %v369, 7
  %v371 = vsub.s32 0, %v370
  %v372 = vrot.slane %v87, %v371
  %v373 = vlaneseq
  %v374 = vshrl.u32 %v373, 7
  %v375 = vsub.s32 0, %v374
  %v376 = vrot.slane %v88, %v375
  %v377 = vlaneseq
  %v378 = vshrl.u32 %v377, 7
  %v379 = vsub.s32 0, %v378
  %v380 = vrot.slane %v89, %v379
  %381 = vset.pattern.permute.xlu0 0
  %382 = vperm.xlu0 %381, %v316
  %v383 = vpop.permute.xlu0 %382
  %385 = vset.pattern.permute.xlu0 0
  %386 = vperm.xlu0 %385, %v320
  %v387 = vpop.permute.xlu0 %386
  %389 = vset.pattern.permute.xlu0 0
  %390 = vperm.xlu0 %389, %v324
  %v391 = vpop.permute.xlu0 %390
  %393 = vset.pattern.permute.xlu0 0
  %394 = vperm.xlu0 %393, %v328
  %v395 = vpop.permute.xlu0 %394
  %397 = vset.pattern.permute.xlu0 0
  %398 = vperm.xlu0 %397, %v332
  %v399 = vpop.permute.xlu0 %398
  %401 = vset.pattern.permute.xlu0 0
  %402 = vperm.xlu0 %401, %v336
  %v403 = vpop.permute.xlu0 %402
  %405 = vset.pattern.permute.xlu0 0
  %406 = vperm.xlu0 %405, %v340
  %v407 = vpop.permute.xlu0 %406
  %409 = vset.pattern.permute.xlu0 0
  %410 = vperm.xlu0 %409, %v344
  %v411 = vpop.permute.xlu0 %410
  %413 = vset.pattern.permute.xlu0 0
  %414 = vperm.xlu0 %413, %v348
  %v415 = vpop.permute.xlu0 %414
  %417 = vset.pattern.permute.xlu0 0
  %418 = vperm.xlu0 %417, %v352
  %v419 = vpop.permute.xlu0 %418
  %421 = vset.pattern.permute.xlu0 0
  %422 = vperm.xlu0 %421, %v356
  %v423 = vpop.permute.xlu0 %422
  %425 = vset.pattern.permute.xlu0 0
  %426 = vperm.xlu0 %425, %v360
  %v427 = vpop.permute.xlu0 %426
  %429 = vset.pattern.permute.xlu0 0
  %430 = vperm.xlu0 %429, %v364
  %v431 = vpop.permute.xlu0 %430
  %433 = vset.pattern.permute.xlu0 0
  %434 = vperm.xlu0 %433, %v368
  %v435 = vpop.permute.xlu0 %434
  %437 = vset.pattern.permute.xlu0 0
  %438 = vperm.xlu0 %437, %v372
  %v439 = vpop.permute.xlu0 %438
  %441 = vset.pattern.permute.xlu0 0
  %442 = vperm.xlu0 %441, %v376
  %v443 = vpop.permute.xlu0 %442
  %445 = vset.pattern.permute.xlu0 0
  %446 = vperm.xlu0 %445, %v380
  %v447 = vpop.permute.xlu0 %446
  %v449 = vmul.f32 %v383, %v51
  %v450 = vmul.f32 %v387, %v51
  %v451 = vmul.f32 %v391, %v51
  %v452 = vmul.f32 %v395, %v51
  %v453 = vmul.f32 %v399, %v51
  %v454 = vmul.f32 %v403, %v51
  %v455 = vmul.f32 %v407, %v51
  %v456 = vmul.f32 %v411, %v51
  %v457 = vmul.f32 %v415, %v51
  %v458 = vmul.f32 %v419, %v51
  %v459 = vmul.f32 %v423, %v51
  %v460 = vmul.f32 %v427, %v51
  %v461 = vmul.f32 %v431, %v51
  %v462 = vmul.f32 %v435, %v51
  %v463 = vmul.f32 %v439, %v51
  %v464 = vmul.f32 %v443, %v51
  %v465 = vmul.f32 %v447, %v51
  %v466 = vadd.f32 %v279, %v449
  %v467 = vadd.f32 %v280, %v450
  %v468 = vadd.f32 %v281, %v451
  %v469 = vadd.f32 %v282, %v452
  %v470 = vadd.f32 %v283, %v453
  %v471 = vadd.f32 %v284, %v454
  %v472 = vadd.f32 %v285, %v455
  %v473 = vadd.f32 %v286, %v456
  %v474 = vadd.f32 %v287, %v457
  %v475 = vadd.f32 %v288, %v458
  %v476 = vadd.f32 %v289, %v459
  %v477 = vadd.f32 %v290, %v460
  %v478 = vadd.f32 %v291, %v461
  %v479 = vadd.f32 %v292, %v462
  %v480 = vadd.f32 %v293, %v463
  %v481 = vadd.f32 %v294, %v464
  %v482 = vadd.f32 %v295, %v465
  %v500 = vlaneseq
  %v501 = vshrl.u32 %v500, 7
  %v502 = vsub.s32 0, %v501
  %v503 = vrot.slane %v91, %v502
  %v504 = vlaneseq
  %v505 = vshrl.u32 %v504, 7
  %v506 = vsub.s32 0, %v505
  %v507 = vrot.slane %v92, %v506
  %v508 = vlaneseq
  %v509 = vshrl.u32 %v508, 7
  %v510 = vsub.s32 0, %v509
  %v511 = vrot.slane %v93, %v510
  %v512 = vlaneseq
  %v513 = vshrl.u32 %v512, 7
  %v514 = vsub.s32 0, %v513
  %v515 = vrot.slane %v94, %v514
  %v516 = vlaneseq
  %v517 = vshrl.u32 %v516, 7
  %v518 = vsub.s32 0, %v517
  %v519 = vrot.slane %v95, %v518
  %v520 = vlaneseq
  %v521 = vshrl.u32 %v520, 7
  %v522 = vsub.s32 0, %v521
  %v523 = vrot.slane %v96, %v522
  %v524 = vlaneseq
  %v525 = vshrl.u32 %v524, 7
  %v526 = vsub.s32 0, %v525
  %v527 = vrot.slane %v97, %v526
  %v528 = vlaneseq
  %v529 = vshrl.u32 %v528, 7
  %v530 = vsub.s32 0, %v529
  %v531 = vrot.slane %v98, %v530
  %v532 = vlaneseq
  %v533 = vshrl.u32 %v532, 7
  %v534 = vsub.s32 0, %v533
  %v535 = vrot.slane %v99, %v534
  %v536 = vlaneseq
  %v537 = vshrl.u32 %v536, 7
  %v538 = vsub.s32 0, %v537
  %v539 = vrot.slane %v100, %v538
  %v540 = vlaneseq
  %v541 = vshrl.u32 %v540, 7
  %v542 = vsub.s32 0, %v541
  %v543 = vrot.slane %v101, %v542
  %v544 = vlaneseq
  %v545 = vshrl.u32 %v544, 7
  %v546 = vsub.s32 0, %v545
  %v547 = vrot.slane %v102, %v546
  %v548 = vlaneseq
  %v549 = vshrl.u32 %v548, 7
  %v550 = vsub.s32 0, %v549
  %v551 = vrot.slane %v103, %v550
  %v552 = vlaneseq
  %v553 = vshrl.u32 %v552, 7
  %v554 = vsub.s32 0, %v553
  %v555 = vrot.slane %v104, %v554
  %v556 = vlaneseq
  %v557 = vshrl.u32 %v556, 7
  %v558 = vsub.s32 0, %v557
  %v559 = vrot.slane %v105, %v558
  %v560 = vlaneseq
  %v561 = vshrl.u32 %v560, 7
  %v562 = vsub.s32 0, %v561
  %v563 = vrot.slane %v106, %v562
  %v564 = vlaneseq
  %v565 = vshrl.u32 %v564, 7
  %v566 = vsub.s32 0, %v565
  %v567 = vrot.slane %v107, %v566
  %568 = vset.pattern.permute.xlu0 0
  %569 = vperm.xlu0 %568, %v503
  %v570 = vpop.permute.xlu0 %569
  %572 = vset.pattern.permute.xlu0 0
  %573 = vperm.xlu0 %572, %v507
  %v574 = vpop.permute.xlu0 %573
  %576 = vset.pattern.permute.xlu0 0
  %577 = vperm.xlu0 %576, %v511
  %v578 = vpop.permute.xlu0 %577
  %580 = vset.pattern.permute.xlu0 0
  %581 = vperm.xlu0 %580, %v515
  %v582 = vpop.permute.xlu0 %581
  %584 = vset.pattern.permute.xlu0 0
  %585 = vperm.xlu0 %584, %v519
  %v586 = vpop.permute.xlu0 %585
  %588 = vset.pattern.permute.xlu0 0
  %589 = vperm.xlu0 %588, %v523
  %v590 = vpop.permute.xlu0 %589
  %592 = vset.pattern.permute.xlu0 0
  %593 = vperm.xlu0 %592, %v527
  %v594 = vpop.permute.xlu0 %593
  %596 = vset.pattern.permute.xlu0 0
  %597 = vperm.xlu0 %596, %v531
  %v598 = vpop.permute.xlu0 %597
  %600 = vset.pattern.permute.xlu0 0
  %601 = vperm.xlu0 %600, %v535
  %v602 = vpop.permute.xlu0 %601
  %604 = vset.pattern.permute.xlu0 0
  %605 = vperm.xlu0 %604, %v539
  %v606 = vpop.permute.xlu0 %605
  %608 = vset.pattern.permute.xlu0 0
  %609 = vperm.xlu0 %608, %v543
  %v610 = vpop.permute.xlu0 %609
  %612 = vset.pattern.permute.xlu0 0
  %613 = vperm.xlu0 %612, %v547
  %v614 = vpop.permute.xlu0 %613
  %616 = vset.pattern.permute.xlu0 0
  %617 = vperm.xlu0 %616, %v551
  %v618 = vpop.permute.xlu0 %617
  %620 = vset.pattern.permute.xlu0 0
  %621 = vperm.xlu0 %620, %v555
  %v622 = vpop.permute.xlu0 %621
  %624 = vset.pattern.permute.xlu0 0
  %625 = vperm.xlu0 %624, %v559
  %v626 = vpop.permute.xlu0 %625
  %628 = vset.pattern.permute.xlu0 0
  %629 = vperm.xlu0 %628, %v563
  %v630 = vpop.permute.xlu0 %629
  %632 = vset.pattern.permute.xlu0 0
  %633 = vperm.xlu0 %632, %v567
  %v634 = vpop.permute.xlu0 %633
  %v636 = vmul.f32 %v570, %v54
  %v637 = vmul.f32 %v574, %v54
  %v638 = vmul.f32 %v578, %v54
  %v639 = vmul.f32 %v582, %v54
  %v640 = vmul.f32 %v586, %v54
  %v641 = vmul.f32 %v590, %v54
  %v642 = vmul.f32 %v594, %v54
  %v643 = vmul.f32 %v598, %v54
  %v644 = vmul.f32 %v602, %v54
  %v645 = vmul.f32 %v606, %v54
  %v646 = vmul.f32 %v610, %v54
  %v647 = vmul.f32 %v614, %v54
  %v648 = vmul.f32 %v618, %v54
  %v649 = vmul.f32 %v622, %v54
  %v650 = vmul.f32 %v626, %v54
  %v651 = vmul.f32 %v630, %v54
  %v652 = vmul.f32 %v634, %v54
  %v653 = vadd.f32 %v466, %v636
  %v654 = vadd.f32 %v467, %v637
  %v655 = vadd.f32 %v468, %v638
  %v656 = vadd.f32 %v469, %v639
  %v657 = vadd.f32 %v470, %v640
  %v658 = vadd.f32 %v471, %v641
  %v659 = vadd.f32 %v472, %v642
  %v660 = vadd.f32 %v473, %v643
  %v661 = vadd.f32 %v474, %v644
  %v662 = vadd.f32 %v475, %v645
  %v663 = vadd.f32 %v476, %v646
  %v664 = vadd.f32 %v477, %v647
  %v665 = vadd.f32 %v478, %v648
  %v666 = vadd.f32 %v479, %v649
  %v667 = vadd.f32 %v480, %v650
  %v668 = vadd.f32 %v481, %v651
  %v669 = vadd.f32 %v482, %v652
  %v687 = vlaneseq
  %v688 = vshrl.u32 %v687, 7
  %v689 = vsub.s32 0, %v688
  %v690 = vrot.slane %v109, %v689
  %v691 = vlaneseq
  %v692 = vshrl.u32 %v691, 7
  %v693 = vsub.s32 0, %v692
  %v694 = vrot.slane %v110, %v693
  %v695 = vlaneseq
  %v696 = vshrl.u32 %v695, 7
  %v697 = vsub.s32 0, %v696
  %v698 = vrot.slane %v111, %v697
  %v699 = vlaneseq
  %v700 = vshrl.u32 %v699, 7
  %v701 = vsub.s32 0, %v700
  %v702 = vrot.slane %v112, %v701
  %v703 = vlaneseq
  %v704 = vshrl.u32 %v703, 7
  %v705 = vsub.s32 0, %v704
  %v706 = vrot.slane %v113, %v705
  %v707 = vlaneseq
  %v708 = vshrl.u32 %v707, 7
  %v709 = vsub.s32 0, %v708
  %v710 = vrot.slane %v114, %v709
  %v711 = vlaneseq
  %v712 = vshrl.u32 %v711, 7
  %v713 = vsub.s32 0, %v712
  %v714 = vrot.slane %v115, %v713
  %v715 = vlaneseq
  %v716 = vshrl.u32 %v715, 7
  %v717 = vsub.s32 0, %v716
  %v718 = vrot.slane %v116, %v717
  %v719 = vlaneseq
  %v720 = vshrl.u32 %v719, 7
  %v721 = vsub.s32 0, %v720
  %v722 = vrot.slane %v117, %v721
  %v723 = vlaneseq
  %v724 = vshrl.u32 %v723, 7
  %v725 = vsub.s32 0, %v724
  %v726 = vrot.slane %v118, %v725
  %v727 = vlaneseq
  %v728 = vshrl.u32 %v727, 7
  %v729 = vsub.s32 0, %v728
  %v730 = vrot.slane %v119, %v729
  %v731 = vlaneseq
  %v732 = vshrl.u32 %v731, 7
  %v733 = vsub.s32 0, %v732
  %v734 = vrot.slane %v120, %v733
  %v735 = vlaneseq
  %v736 = vshrl.u32 %v735, 7
  %v737 = vsub.s32 0, %v736
  %v738 = vrot.slane %v121, %v737
  %v739 = vlaneseq
  %v740 = vshrl.u32 %v739, 7
  %v741 = vsub.s32 0, %v740
  %v742 = vrot.slane %v122, %v741
  %v743 = vlaneseq
  %v744 = vshrl.u32 %v743, 7
  %v745 = vsub.s32 0, %v744
  %v746 = vrot.slane %v123, %v745
  %v747 = vlaneseq
  %v748 = vshrl.u32 %v747, 7
  %v749 = vsub.s32 0, %v748
  %v750 = vrot.slane %v124, %v749
  %v751 = vlaneseq
  %v752 = vshrl.u32 %v751, 7
  %v753 = vsub.s32 0, %v752
  %v754 = vrot.slane %v125, %v753
  %755 = vset.pattern.permute.xlu0 0
  %756 = vperm.xlu0 %755, %v690
  %v757 = vpop.permute.xlu0 %756
  %759 = vset.pattern.permute.xlu0 0
  %760 = vperm.xlu0 %759, %v694
  %v761 = vpop.permute.xlu0 %760
  %763 = vset.pattern.permute.xlu0 0
  %764 = vperm.xlu0 %763, %v698
  %v765 = vpop.permute.xlu0 %764
  %767 = vset.pattern.permute.xlu0 0
  %768 = vperm.xlu0 %767, %v702
  %v769 = vpop.permute.xlu0 %768
  %771 = vset.pattern.permute.xlu0 0
  %772 = vperm.xlu0 %771, %v706
  %v773 = vpop.permute.xlu0 %772
  %775 = vset.pattern.permute.xlu0 0
  %776 = vperm.xlu0 %775, %v710
  %v777 = vpop.permute.xlu0 %776
  %779 = vset.pattern.permute.xlu0 0
  %780 = vperm.xlu0 %779, %v714
  %v781 = vpop.permute.xlu0 %780
  %783 = vset.pattern.permute.xlu0 0
  %784 = vperm.xlu0 %783, %v718
  %v785 = vpop.permute.xlu0 %784
  %787 = vset.pattern.permute.xlu0 0
  %788 = vperm.xlu0 %787, %v722
  %v789 = vpop.permute.xlu0 %788
  %791 = vset.pattern.permute.xlu0 0
  %792 = vperm.xlu0 %791, %v726
  %v793 = vpop.permute.xlu0 %792
  %795 = vset.pattern.permute.xlu0 0
  %796 = vperm.xlu0 %795, %v730
  %v797 = vpop.permute.xlu0 %796
  %799 = vset.pattern.permute.xlu0 0
  %800 = vperm.xlu0 %799, %v734
  %v801 = vpop.permute.xlu0 %800
  %803 = vset.pattern.permute.xlu0 0
  %804 = vperm.xlu0 %803, %v738
  %v805 = vpop.permute.xlu0 %804
  %807 = vset.pattern.permute.xlu0 0
  %808 = vperm.xlu0 %807, %v742
  %v809 = vpop.permute.xlu0 %808
  %811 = vset.pattern.permute.xlu0 0
  %812 = vperm.xlu0 %811, %v746
  %v813 = vpop.permute.xlu0 %812
  %815 = vset.pattern.permute.xlu0 0
  %816 = vperm.xlu0 %815, %v750
  %v817 = vpop.permute.xlu0 %816
  %819 = vset.pattern.permute.xlu0 0
  %820 = vperm.xlu0 %819, %v754
  %v821 = vpop.permute.xlu0 %820
  %v823 = vadd.f32 %v653, %v757
  %v824 = vadd.f32 %v654, %v761
  %v825 = vadd.f32 %v655, %v765
  %v826 = vadd.f32 %v656, %v769
  %v827 = vadd.f32 %v657, %v773
  %v828 = vadd.f32 %v658, %v777
  %v829 = vadd.f32 %v659, %v781
  %v830 = vadd.f32 %v660, %v785
  %v831 = vadd.f32 %v661, %v789
  %v832 = vadd.f32 %v662, %v793
  %v833 = vadd.f32 %v663, %v797
  %v834 = vadd.f32 %v664, %v801
  %v835 = vadd.f32 %v665, %v805
  %v836 = vadd.f32 %v666, %v809
  %v837 = vadd.f32 %v667, %v813
  %v838 = vadd.f32 %v668, %v817
  %v839 = vadd.f32 %v669, %v821
  %840 = vst [vmem:[%s2] sm:$0xff] %v823
  %841 = vst [vmem:[%s2 + $0x8] sm:$0xff] %v824
  %842 = vst [vmem:[%s2 + $0x10] sm:$0xff] %v825
  %843 = vst [vmem:[%s2 + $0x18] sm:$0xff] %v826
  %844 = vst [vmem:[%s2 + $0x20] sm:$0xff] %v827
  %845 = vst [vmem:[%s2 + $0x28] sm:$0xff] %v828
  %846 = vst [vmem:[%s2 + $0x30] sm:$0xff] %v829
  %847 = vst [vmem:[%s2 + $0x38] sm:$0xff] %v830
  %848 = vst [vmem:[%s2 + $0x40] sm:$0xff] %v831
  %849 = vst [vmem:[%s2 + $0x48] sm:$0xff] %v832
  %850 = vst [vmem:[%s2 + $0x50] sm:$0xff] %v833
  %851 = vst [vmem:[%s2 + $0x58] sm:$0xff] %v834
  %852 = vst [vmem:[%s2 + $0x60] sm:$0xff] %v835
  %853 = vst [vmem:[%s2 + $0x68] sm:$0xff] %v836
  %854 = vst [vmem:[%s2 + $0x70] sm:$0xff] %v837
  %855 = vst [vmem:[%s2 + $0x78] sm:$0xff] %v838
  %856 = vst [vmem:[%s2 + $0x80] sm:$0xff] %v839
  // Predicated region
  $region10: #{output_layer_forward.1} parent=0 // pred_check
    _
  $region11: #{output_layer_forward.1} parent=0 // pred_check_branch
    %858 = sbr.rel (0) target = $region13
  $region12: #{output_layer_forward.1} parent=0 // pred_region
    _
  $region13: #{output_layer_forward.1} parent=0 // pred_fallthru
    _
  // Predicated region
  $region14: #{output_layer_forward.1} parent=0 // pred_check
    _
  $region15: #{output_layer_forward.1} parent=0 // pred_check_branch
    %860 = sbr.rel (0) target = $region17
  $region16: #{output_layer_forward.1} parent=0 // pred_region
    _
  $region17: #{output_layer_forward.1} parent=0 // pred_fallthru
    _

</llo_original>
